<compile_context>
chip_gen: v6e
topology: v6e:2x2x1
jax: 0.10.0
libtpu: 0.0.40
codegen_flags: <defaults>
</compile_context>

<pallas_src>
import functools
import math

import jax
import jax.numpy as jnp
from jax.experimental import pallas as pl
from jax.experimental.pallas import tpu as pltpu

LANE = 128
TILE_BYTES_PER_INPUT = 4 * 1024 * 1024  # ~4 MiB of each input per grid step


def _round_up(a, b):
    return ((a + b - 1) // b) * b


def _bc_huber_kernel(x_ref, t_ref, o_ref, *, pos_weight, steps, num_tiles,
                     last_tile_rows, needs_row_mask, has_phantom):
    c = pl.program_id(0)   # TensorCore-split index ("parallel")
    i = pl.program_id(1)   # streaming / reduction step ("arbitrary")

    @pl.when(i == 0)
    def _():
        o_ref[...] = jnp.zeros_like(o_ref)

    x = x_ref[...].astype(jnp.float32)
    t = t_ref[...].astype(jnp.float32)
    tx = t * x
    hinge = jnp.maximum(1.0 - tx, 0.0)
    loss = jnp.where(tx > -1.0, hinge * hinge, -4.0 * tx)
    if pos_weight is not None:
        loss = jnp.where(t == 1.0, jnp.float32(pos_weight) * loss, loss)

    def fold(v):
        # (tile_rows, 128) -> (8, 128) partial sums; pure VPU vreg adds,
        # layout-preserving reshape (splits the major dim only).
        return jnp.sum(v.reshape(-1, 8, LANE), axis=0)

    if (not needs_row_mask) and (not has_phantom):
        o_ref[...] += fold(loss)
    else:
        flat = c * steps + i                      # flat block index
        full_limit = num_tiles - 1 if needs_row_mask else num_tiles

        @pl.when(flat < full_limit)               # full, valid blocks
        def _():
            o_ref[...] += fold(loss)

        if needs_row_mask:
            @pl.when(flat == num_tiles - 1)       # ragged last block
            def _():
                # Rows >= last_tile_rows hold Pallas-padded (unspecified)
                # data; zero them before accumulating.
                row = jax.lax.broadcasted_iota(jnp.int32, loss.shape, 0)
                o_ref[...] += fold(jnp.where(row < last_tile_rows, loss, 0.0))
        # flat > num_tiles - 1 (phantom block on odd tile counts): skipped.


def bc_huber_loss(inp, target, pos_weight=None, reduction="mean"):
    """Pallas implementation of BCHuberLoss.forward.

    pos_weight, if given, must be a Python float (scalar weight applied where
    target == 1).  A broadcastable *tensor* pos_weight is not supported.
    """
    assert inp.shape == target.shape
    n_valid = math.prod(inp.shape)

    x = jnp.ravel(inp)          # free reshape, original dtype kept
    t = jnp.ravel(target)

    # Lane remainder (numel % 128 != 0) falls back to a small pad so the
    # (rows, 128) view is legal.  Pad values x=2, t=1 are loss-neutral even
    # under pos_weight.
    # TODO(synk): the concatenate copies the full array for non-multiple-of-
    # 128 sizes; a copy-free path would need 1-D / raw-HBM blocking.
    pad = (-n_valid) % LANE
    if pad:
        x = jnp.concatenate([x, jnp.full((pad,), 2, x.dtype)])
        t = jnp.concatenate([t, jnp.ones((pad,), t.dtype)])

    rows = (n_valid + pad) // LANE
    x2 = x.reshape(rows, LANE)
    t2 = t.reshape(rows, LANE)

    itemsize = jnp.dtype(inp.dtype).itemsize
    sub = max(8, 32 // max(itemsize, 1))          # f32: 8, bf16: 16, int8: 32
    max_rows = TILE_BYTES_PER_INPUT // (LANE * itemsize)
    max_rows = max(sub, (max_rows // sub) * sub)
    tile_rows = min(max_rows, _round_up(rows, sub))

    num_tiles = -(-rows // tile_rows)
    # Always split across the two TensorCores (v7x) when there is more than
    # one tile; odd counts get one clamped "phantom" block whose accumulation
    # is skipped in-kernel.  Harmless (sequential) on single-core chips.
    splits = 2 if num_tiles >= 2 else 1
    steps = -(-num_tiles // splits)
    has_phantom = splits * steps != num_tiles
    needs_row_mask = (rows % tile_rows) != 0
    last_tile_rows = rows - (num_tiles - 1) * tile_rows

    if has_phantom:
        def in_index(c, i):
            return (jnp.minimum(c * steps + i, num_tiles - 1), 0)
    else:
        def in_index(c, i):
            return (c * steps + i, 0)

    kernel = functools.partial(
        _bc_huber_kernel,
        pos_weight=pos_weight,
        steps=steps,
        num_tiles=num_tiles,
        last_tile_rows=last_tile_rows,
        needs_row_mask=needs_row_mask,
        has_phantom=has_phantom,
    )

    bytes_accessed = (x2.size * x2.dtype.itemsize
                      + t2.size * t2.dtype.itemsize
                      + splits * 8 * LANE * 4)
    cost = pl.CostEstimate(flops=8 * n_valid, transcendentals=0,
                           bytes_accessed=bytes_accessed)

    partials = pl.pallas_call(
        kernel,
        out_shape=jax.ShapeDtypeStruct((splits * 8, LANE), jnp.float32),
        grid_spec=pltpu.PrefetchScalarGridSpec(
            num_scalar_prefetch=0,
            grid=(splits, steps),
            in_specs=[
                pl.BlockSpec((tile_rows, LANE), in_index),
                pl.BlockSpec((tile_rows, LANE), in_index),
            ],
            out_specs=pl.BlockSpec((8, LANE), lambda c, i: (c, 0)),
        ),
        compiler_params=pltpu.CompilerParams(
            dimension_semantics=("parallel", "arbitrary"),
            vmem_limit_bytes=40 * 1024 * 1024,
        ),
        cost_estimate=cost,
    )(x2, t2)

    total = jnp.sum(partials)
    if reduction == "mean":
        total = total / jnp.float32(n_valid)
    return total


def _reference(inp, target, pos_weight=None, reduction="mean"):
    inp = inp.astype(jnp.float32)
    target = target.astype(jnp.float32)
    tx = target * inp
    loss = jnp.where(tx > -1, jnp.maximum(1 - tx, 0.0) ** 2, -4 * tx)
    if pos_weight is not None:
        loss = jnp.where(target == 1, pos_weight * loss, loss)
    return jnp.mean(loss) if reduction == "mean" else jnp.sum(loss)


if __name__ == "__main__":
    key = jax.random.PRNGKey(0)
    k1, k2, k3, k4, k5, k6 = jax.random.split(key, 6)

    # 1) Small NCHW f32 input, mean reduction.
    x = jax.random.normal(k1, (2, 4, 16, 16), dtype=jnp.float32)
    t = jnp.sign(jax.random.normal(k2, (2, 4, 16, 16), dtype=jnp.float32))
    out = jax.block_until_ready(bc_huber_loss(x, t))
    ref = _reference(x, t)
    assert jnp.allclose(out, ref, rtol=1e-5, atol=1e-5), (out, ref)

    # 2) pos_weight (scalar) + sum reduction.
    out2 = jax.block_until_ready(
        bc_huber_loss(x, t, pos_weight=2.5, reduction="sum"))
    ref2 = _reference(x, t, pos_weight=2.5, reduction="sum")
    assert jnp.allclose(out2, ref2, rtol=1e-5, atol=1e-5), (out2, ref2)

    # 3) Ragged size: exercises the lane-pad fallback + in-kernel row mask.
    xr = jax.random.normal(k3, (3, 5, 7, 11), dtype=jnp.float32)
    tr = jnp.sign(jax.random.normal(k4, (3, 5, 7, 11), dtype=jnp.float32))
    out3 = jax.block_until_ready(bc_huber_loss(xr, tr))
    ref3 = _reference(xr, tr)
    assert jnp.allclose(out3, ref3, rtol=1e-5, atol=1e-5), (out3, ref3)

    # 4) bf16 inputs (no wrapper upcast, 16-sublane rounding).
    xb = jax.random.normal(k1, (2, 8, 128, 128), dtype=jnp.bfloat16)
    tb = jnp.sign(jax.random.normal(k2, (2, 8, 128, 128))).astype(jnp.bfloat16)
    out4 = jax.block_until_ready(bc_huber_loss(xb, tb))
    ref4 = _reference(xb, tb)
    assert jnp.allclose(out4, ref4, rtol=1e-3, atol=1e-3), (out4, ref4)

    # 5) Large odd-tile-count ragged input: exercises the 2-way core split,
    #    the clamped phantom block, the ragged row mask and the lane pad.
    xl = jax.random.normal(k5, (2_200_037,), dtype=jnp.float32)
    tl = jnp.sign(jax.random.normal(k6, (2_200_037,), dtype=jnp.float32))
    out5 = jax.block_until_ready(bc_huber_loss(xl, tl))
    ref5 = _reference(xl, tl)
    assert jnp.allclose(out5, ref5, rtol=1e-3, atol=1e-5), (out5, ref5)

    print("KERNEL_OK")
</pallas_src>

<mosaic_0001>
module attributes {stable_mosaic.version = 11 : i64} {
  func.func @_bc_huber_kernel(%arg0: i32, %arg1: i32, %arg2: memref<16x128xf32, #tpu.memory_space<vmem>>, %arg3: memref<16x128xf32, #tpu.memory_space<vmem>>, %arg4: memref<8x128xf32, #tpu.memory_space<vmem>>) attributes {dimension_semantics = [#tpu.dimension_semantics<parallel>, #tpu.dimension_semantics<arbitrary>], iteration_bounds = array<i64: 1, 1>, scalar_prefetch = 0 : i64, scratch_operands = 0 : i64, tpu.core_type = #tpu.core_type<tc>, window_params = [{transform_indices = @transform_0, window_bounds = array<i64: 16, 128>}, {transform_indices = @transform_1, window_bounds = array<i64: 16, 128>}, {transform_indices = @transform_2, window_bounds = array<i64: 8, 128>}]} {
    %c0_i32 = arith.constant 0 : i32
    %0 = arith.cmpi eq, %arg1, %c0_i32 : i32
    %1 = arith.extui %0 : i1 to i32
    %c0_i32_0 = arith.constant 0 : i32
    %2 = arith.cmpi ne, %1, %c0_i32_0 : i32
    scf.if %2 {
      %cst_12 = arith.constant 0.000000e+00 : f32
      %21 = vector.broadcast %cst_12 : f32 to vector<8x128xf32>
      %c0_13 = arith.constant 0 : index
      %c0_14 = arith.constant 0 : index
      %22 = vector.load %arg4[%c0_13, %c0_14] : memref<8x128xf32, #tpu.memory_space<vmem>>, vector<8x128xf32>
      tpu.vector_store %arg4[%c0_13, %c0_14], %21 {strides = array<i32>} : memref<8x128xf32, #tpu.memory_space<vmem>>, vector<8x128xf32>,
    } else {
    }
    %c0 = arith.constant 0 : index
    %c0_1 = arith.constant 0 : index
    %3 = vector.load %arg2[%c0, %c0_1] : memref<16x128xf32, #tpu.memory_space<vmem>>, vector<16x128xf32>
    %c0_2 = arith.constant 0 : index
    %c0_3 = arith.constant 0 : index
    %4 = vector.load %arg3[%c0_2, %c0_3] : memref<16x128xf32, #tpu.memory_space<vmem>>, vector<16x128xf32>
    %5 = arith.mulf %4, %3 : vector<16x128xf32>
    %cst = arith.constant 1.000000e+00 : f32
    %6 = vector.broadcast %cst : f32 to vector<16x128xf32>
    %7 = arith.subf %6, %5 : vector<16x128xf32>
    %cst_4 = arith.constant 0.000000e+00 : f32
    %8 = vector.broadcast %cst_4 : f32 to vector<16x128xf32>
    %9 = arith.maximumf %7, %8 : vector<16x128xf32>
    %cst_5 = arith.constant -1.000000e+00 : f32
    %10 = vector.broadcast %cst_5 : f32 to vector<16x128xf32>
    %11 = arith.cmpf ogt, %5, %10 : vector<16x128xf32>
    %12 = arith.mulf %9, %9 : vector<16x128xf32>
    %cst_6 = arith.constant -4.000000e+00 : f32
    %13 = vector.broadcast %cst_6 : f32 to vector<16x128xf32>
    %14 = arith.mulf %13, %5 : vector<16x128xf32>
    %15 = arith.select %11, %12, %14 : vector<16x128xi1>, vector<16x128xf32>
    %c0_7 = arith.constant 0 : index
    %c0_8 = arith.constant 0 : index
    %16 = vector.load %arg4[%c0_7, %c0_8] : memref<8x128xf32, #tpu.memory_space<vmem>>, vector<8x128xf32>
    %17 = vector.shape_cast %15 : vector<16x128xf32> to vector<2x8x128xf32>
    %cst_9 = arith.constant dense<0.000000e+00> : vector<8x128xf32>
    %18 = vector.multi_reduction <add>, %17, %cst_9 [0] : vector<2x8x128xf32> to vector<8x128xf32>
    %19 = arith.addf %16, %18 : vector<8x128xf32>
    %c0_10 = arith.constant 0 : index
    %c0_11 = arith.constant 0 : index
    %20 = vector.load %arg4[%c0_10, %c0_11] : memref<8x128xf32, #tpu.memory_space<vmem>>, vector<8x128xf32>
    tpu.vector_store %arg4[%c0_10, %c0_11], %19 {strides = array<i32>} : memref<8x128xf32, #tpu.memory_space<vmem>>, vector<8x128xf32>,
    return
  }
  func.func @transform_0(%arg0: i32, %arg1: i32) -> (i32, i32) {
    %c1_i32 = arith.constant 1 : i32
    %0 = arith.muli %arg0, %c1_i32 : i32
    %1 = arith.addi %0, %arg1 : i32
    %c0_i32 = arith.constant 0 : i32
    %c0_i32_0 = arith.constant 0 : i32
    return %1, %c0_i32 : i32, i32
  }
  func.func @transform_1(%arg0: i32, %arg1: i32) -> (i32, i32) {
    %c1_i32 = arith.constant 1 : i32
    %0 = arith.muli %arg0, %c1_i32 : i32
    %1 = arith.addi %0, %arg1 : i32
    %c0_i32 = arith.constant 0 : i32
    %c0_i32_0 = arith.constant 0 : i32
    return %1, %c0_i32 : i32, i32
  }
  func.func @transform_2(%arg0: i32, %arg1: i32) -> (i32, i32) {
    %c0_i32 = arith.constant 0 : i32
    %c0_i32_0 = arith.constant 0 : i32
    return %arg0, %c0_i32 : i32, i32
  }
}

</mosaic_0001>

<llo_original>
// kernel: tpu_custom_call.1
$region0: #{tpu_custom_call.1}
  #allocation0 [shape = 'u32[]', space=smem, size = 0x4, offset = 0x4, fixed_abs, tag = 'smem constant byte address 0x4 - core index']
  #allocation1 [shape = 'u32[144,128]{1,0:T(1,128)}', space=vmem, size = 0x12000, scoped, tag = 'internal scratch']
  %s0 = inlined_call_operand.hbm [shape: f32[16,128], index: 0, kind: input, shape index: {}]
  %s1 = inlined_call_operand.hbm [shape: f32[16,128], index: 1, kind: input, shape index: {}]
  %s2 = inlined_call_operand.hbm [shape: f32[8,128], index: 2, kind: output, shape index: {}]
  %s3 = sld [smem:[#allocation0]]
  $region30: #{tpu_custom_call.1} parent=0
    _
  %s5 = ssub.s32 1, %s3
  %s6 = scalar_select 0, %s5, %s3
  $region1: #{tpu_custom_call.1} parent=0
    #allocation2 [shape = 'u8[8192]{0}', space=vmem, size = 0x2000, scoped, tag = 'input window, operand 0, single buffered']
    #allocation3 [shape = 's32[1]{0}', space=sflag, size = 0x4, scoped, tag = 'scoped memory for tpu_custom_call.1']
    #allocation4 [shape = 's32[1]{0}', space=sflag, size = 0x4, scoped, tag = 'scoped memory for tpu_custom_call.1']
    #allocation5 [shape = 'u8[8192]{0}', space=vmem, size = 0x2000, scoped, tag = 'input window, operand 1, single buffered']
    #allocation6 [shape = 's32[1]{0}', space=sflag, size = 0x4, scoped, tag = 'scoped memory for tpu_custom_call.1']
    #allocation7 [shape = 'u8[4096]{0}', space=vmem, size = 0x1000, scoped, tag = 'output window, operand 0, single buffered']
    %7 = vsyncpa [#allocation3], 0
    %8 = vsyncpa [#allocation6], 0
    %9 = vsyncpa [#allocation4], 0
    // Predicated region
    $region2: #{tpu_custom_call.1} parent=1 // pred_check
      _
    $region3: #{tpu_custom_call.1} parent=1 // pred_check_branch
      %11 = sbr.rel (0) target = $region5
    $region4: #{tpu_custom_call.1} parent=1 // pred_region
      %s12 = sadd.s32 0, 0
      %s13 = smul.u32 2, %s12
      %s15 = ssub.s32 256, 256
      %16 = vsyncadd [#allocation3], %s15
      %s17 = smul.addr %s13, 128
      %s18 = scalar_lea.hbm %s0, %s17
      %s19 = sshll.u32 [#allocation2], 4
      %s20 = int_to_ptr.vmem [resolvable:$true] %s19
      %25 = dma.hbm_to_vmem [thread:$0]  %s18, 256, %s20, [#allocation3], 128, 128, 8
    $region5: #{tpu_custom_call.1} parent=1 // pred_fallthru
      _
    // Predicated region
    $region6: #{tpu_custom_call.1} parent=1 // pred_check
      _
    $region7: #{tpu_custom_call.1} parent=1 // pred_check_branch
      %27 = sbr.rel (0) target = $region9
    $region8: #{tpu_custom_call.1} parent=1 // pred_region
      %s28 = sadd.s32 0, 0
      %s29 = smul.u32 2, %s28
      %s31 = ssub.s32 256, 256
      %32 = vsyncadd [#allocation6], %s31
      %s33 = smul.addr %s29, 128
      %s34 = scalar_lea.hbm %s1, %s33
      %s35 = sshll.u32 [#allocation5], 4
      %s36 = int_to_ptr.vmem [resolvable:$true] %s35
      %41 = dma.hbm_to_vmem [thread:$0]  %s34, 256, %s36, [#allocation6], 128, 128, 8
    $region9: #{tpu_custom_call.1} parent=1 // pred_fallthru
      _
    // Predicated region
    $region10: #{tpu_custom_call.1} parent=1 // pred_check
      _
    $region11: #{tpu_custom_call.1} parent=1 // pred_check_branch
      %43 = sbr.rel (0) target = $region13
    $region12: #{tpu_custom_call.1} parent=1 // pred_region
      %44 = dma.done [#allocation3], 256
    $region13: #{tpu_custom_call.1} parent=1 // pred_fallthru
      _
    // Predicated region
    $region14: #{tpu_custom_call.1} parent=1 // pred_check
      _
    $region15: #{tpu_custom_call.1} parent=1 // pred_check_branch
      %46 = sbr.rel (0) target = $region17
    $region16: #{tpu_custom_call.1} parent=1 // pred_region
      %47 = dma.done [#allocation6], 256
    $region17: #{tpu_custom_call.1} parent=1 // pred_fallthru
      _
    %s48 = sadd.s32 0, 0
    %s49 = smul.u32 2, %s48
    %s50 = sadd.s32 0, 0
    %s51 = smul.u32 2, %s50
    %p52 = scmp.eq.s32.totalorder 0, 0
    // Predicated region
    $region18: #{tpu_custom_call.1} parent=1 // pred_check
      %p53 = pneg %p52
    $region19: #{tpu_custom_call.1} parent=1 // pred_check_branch
      %55 = sbr.rel (%p53) target = $region21
    $region20: #{tpu_custom_call.1} parent=1 // pred_region
      %56 = vst [vmem:[#allocation7] sm:$0xff] 0.0
    $region21: #{tpu_custom_call.1} parent=1 // pred_fallthru
      _
    %v57 = vld [vmem:[#allocation2] sm:$0xff]
    %v58 = vld [vmem:[#allocation2 + $0x8] sm:$0xff]
    %v59 = vld [vmem:[#allocation5] sm:$0xff]
    %v60 = vld [vmem:[#allocation5 + $0x8] sm:$0xff]
    %v61 = vmul.f32 %v59, %v57
    %v62 = vmul.f32 %v60, %v58
    %v63 = vsub.f32 1.0, %v61
    %v64 = vsub.f32 1.0, %v62
    %v65 = vmax.f32 %v63, 0.0
    %v66 = vmax.f32 %v64, 0.0
    %vm67 = vcmp.gt.f32.partialorder %v61, -1.0
    %vm68 = vcmp.gt.f32.partialorder %v62, -1.0
    %v69 = vmul.f32 %v65, %v65
    %v70 = vmul.f32 %v66, %v66
    %v71 = vmul.f32 %v61, -4.0
    %v72 = vmul.f32 %v62, -4.0
    %v73 = vsel %vm67, %v69, %v71
    %v74 = vsel %vm68, %v70, %v72
    %v75 = vld [vmem:[#allocation7] sm:$0xff]
    %v76 = vadd.f32 %v73, %v74
    %v77 = vadd.f32 %v75, %v76
    %78 = vst [vmem:[#allocation7] sm:$0xff] %v77
    // Predicated region
    $region22: #{tpu_custom_call.1} parent=1 // pred_check
      _
    $region23: #{tpu_custom_call.1} parent=1 // pred_check_branch
      %80 = sbr.rel (0) target = $region25
    $region24: #{tpu_custom_call.1} parent=1 // pred_region
      %s82 = ssub.s32 128, 128
      %83 = vsyncadd [#allocation4], %s82
      %s85 = sshll.u32 [#allocation7], 4
      %s86 = int_to_ptr.vmem [resolvable:$true] %s85
      %88 = dma.vmem_to_hbm [thread:$0]  %s86, 128, %s2, [#allocation4]
    $region25: #{tpu_custom_call.1} parent=1 // pred_fallthru
      _
    // Predicated region
    $region26: #{tpu_custom_call.1} parent=1 // pred_check
      _
    $region27: #{tpu_custom_call.1} parent=1 // pred_check_branch
      %90 = sbr.rel (0) target = $region29
    $region28: #{tpu_custom_call.1} parent=1 // pred_region
      %91 = dma.done [#allocation4], 128
    $region29: #{tpu_custom_call.1} parent=1 // pred_fallthru
      _
    %92 = vsyncpa [#allocation3], 1
    %93 = vsyncpa [#allocation6], 1
    %94 = vsyncpa [#allocation4], 1

</llo_original>
